<compile_context>
chip_gen: v5e
topology: v5e:2x2
jax: 0.10.0
libtpu: 0.0.40
codegen_flags: <defaults>
</compile_context>

<pallas_src>
import functools

import jax
import jax.numpy as jnp
from jax.experimental import pallas as pl
from jax.experimental.pallas import tpu as pltpu


def _round_up(v, m):
    return -(-v // m) * m


def _choose_block_rows(n, k, itemsize, block_rows=None,
                       budget_bytes=2 * 1024 * 1024):
    """Batch-tile height, sized from the in-kernel f32 working set.

    The f32 cast of the logits block and the exp() temporary dominate VMEM, so
    the budget is expressed in f32 elements (no artificial row cap).  Rows are
    a multiple of the sublane packing for the native dtype.
    """
    mult = 8 if itemsize >= 4 else (16 if itemsize == 2 else 32)
    cap = _round_up(n, mult)
    if block_rows is not None:
        return max(mult, min(_round_up(block_rows, mult), cap))
    rows = budget_bytes // (k * 4)            # budget counted in f32 bytes
    rows = max(mult, (rows // mult) * mult)
    return min(rows, cap)


def penalty_l1_kernel(x_ref, tgt_ref, out_ref, ce_acc, l1_acc,
                      *, num_classes: int, n_total: int,
                      tiles_per_core: int, need_mask: bool):
    c = pl.program_id(0)              # core (parallel) axis
    i = pl.program_id(1)              # batch-tile (reduction) axis
    n_inner = pl.num_programs(1)
    tn, k = x_ref.shape

    @pl.when(i == 0)
    def _init():
        ce_acc[...] = jnp.zeros_like(ce_acc)
        l1_acc[...] = jnp.zeros_like(l1_acc)

    x = x_ref[...].astype(jnp.float32)        # (TN, K) native dtype -> f32
    tgt = tgt_ref[...]                        # (TN, 1) int32

    if need_mask:
        # Only emitted for ragged batches (virtual/padded rows exist).
        row_ids = (c * tiles_per_core + i) * tn + \
            jax.lax.broadcasted_iota(jnp.int32, (tn, 1), 0)
        valid = row_ids < n_total             # (TN, 1)
        x = jnp.where(valid, x, 0.0)          # keep padded rows finite

    # Numerically-stable softmax / logsumexp pieces.
    m = jnp.max(x, axis=-1, keepdims=True)                  # (TN, 1)
    ex = jnp.exp(x - m)                                     # (TN, K)
    denom = jnp.sum(ex, axis=-1, keepdims=True)             # (TN, 1)
    lse = m + jnp.log(denom)                                # (TN, 1)

    # Cross entropy via in-kernel one-hot (iota == target); no gather.
    class_ids = jax.lax.broadcasted_iota(jnp.int32, (tn, k), 1)
    picked = jnp.sum(jnp.where(class_ids == tgt, x, 0.0),
                     axis=-1, keepdims=True)                # (TN, 1)
    ce_rows = lse - picked

    # L1 penalty: sum_k |s - 1/K| == (1/denom) * sum_k |ex - denom/K|.
    inv_denom = pl.reciprocal(denom, approx=True)           # EUP, (TN, 1)
    l1_rows = inv_denom * jnp.sum(jnp.abs(ex - denom * (1.0 / num_classes)),
                                  axis=-1, keepdims=True)

    if need_mask:
        ce_rows = jnp.where(valid, ce_rows, 0.0)
        l1_rows = jnp.where(valid, l1_rows, 0.0)

    # Vector accumulation (VPU only); cross-sublane reduce deferred to finalize.
    ce_acc[...] += ce_rows
    l1_acc[...] += l1_rows

    @pl.when(i == n_inner - 1)
    def _finalize():
        ce_p = jnp.sum(ce_acc[...])           # per-core partial sums
        l1_p = jnp.sum(l1_acc[...])
        lane = jax.lax.broadcasted_iota(jnp.int32, (1, 8, 128), 2)
        out_ref[...] = jnp.where(lane == 0, ce_p,
                                 jnp.where(lane == 1, l1_p, 0.0))


def penalty_l1(inputs, targets, num_classes, alpha=1.0, block_rows=None,
               num_cores=2):
    """inputs: (N, K) float logits (any float dtype, DMA'd as-is);
    targets: (N,) int labels.  Returns (loss, loss_ce, loss_l1)."""
    n, k = inputs.shape
    assert k == num_classes

    tn = _choose_block_rows(n, k, inputs.dtype.itemsize, block_rows)
    num_real_tiles = pl.cdiv(n, tn)
    num_cores = max(1, min(num_cores, num_real_tiles))
    tiles_per_core = pl.cdiv(num_real_tiles, num_cores)
    num_virtual_tiles = num_cores * tiles_per_core
    need_mask = (num_virtual_tiles * tn) != n

    if num_virtual_tiles > num_real_tiles:
        # Clamp fully out-of-range virtual tiles onto the last real tile;
        # their rows are masked out by `valid` inside the kernel.
        def tile_map(c, i):
            return (jnp.minimum(c * tiles_per_core + i, num_real_tiles - 1), 0)
    else:
        def tile_map(c, i):
            return (c * tiles_per_core + i, 0)

    targets2d = targets.reshape(n, 1).astype(jnp.int32)

    kernel = functools.partial(penalty_l1_kernel, num_classes=num_classes,
                               n_total=n, tiles_per_core=tiles_per_core,
                               need_mask=need_mask)

    out = pl.pallas_call(
        kernel,
        out_shape=jax.ShapeDtypeStruct((num_cores, 8, 128), jnp.float32),
        grid_spec=pltpu.PrefetchScalarGridSpec(
            num_scalar_prefetch=0,
            grid=(num_cores, tiles_per_core),
            in_specs=[pl.BlockSpec((tn, k), tile_map),
                      pl.BlockSpec((tn, 1), tile_map)],
            out_specs=pl.BlockSpec((1, 8, 128), lambda c, i: (c, 0, 0)),
            scratch_shapes=[pltpu.VMEM((tn, 1), jnp.float32),
                            pltpu.VMEM((tn, 1), jnp.float32)]),
        compiler_params=pltpu.CompilerParams(
            dimension_semantics=("parallel", "arbitrary"),
            vmem_limit_bytes=32 * 1024 * 1024),
    )(inputs, targets2d)

    # Combine per-core partial sums and normalize by the GLOBAL batch size.
    ce = jnp.sum(out[:, 0, 0]) / n
    l1 = jnp.sum(out[:, 0, 1]) / n
    loss = ce + alpha * l1
    return loss, ce, l1


def penalty_l1_ref(inputs, targets, num_classes, alpha=1.0):
    x = inputs.astype(jnp.float32)
    logp = jax.nn.log_softmax(x, axis=1)
    ce = -jnp.mean(jnp.take_along_axis(logp, targets[:, None], axis=1))
    s = jnp.exp(logp)
    l1 = jnp.sum(jnp.abs(s - 1.0 / num_classes)) / x.shape[0]
    return ce + alpha * l1, ce, l1


if __name__ == "__main__":
    key = jax.random.PRNGKey(0)

    def check(got, want):
        for g, w in zip(got, want):
            assert jnp.allclose(g, w, atol=2e-3, rtol=2e-3), (g, w)

    # Test 1: f32 logits, exact tiling (masking statically skipped), 1 tile.
    N, K, alpha = 8, 32, 1.0
    k_x, k_t, key = jax.random.split(key, 3)
    x1 = jax.random.normal(k_x, (N, K), dtype=jnp.float32)
    t1 = jax.random.randint(k_t, (N,), 0, K, dtype=jnp.int32)
    got1 = penalty_l1(x1, t1, K, alpha)
    jax.block_until_ready(got1)
    check(got1, penalty_l1_ref(x1, t1, K, alpha))

    # Test 2: bf16 logits, 2-core split, padded last tile (N=20, TN=16).
    N2, K2, alpha2 = 20, 32, 0.5
    k_x2, k_t2, key = jax.random.split(key, 3)
    x2 = jax.random.normal(k_x2, (N2, K2), dtype=jnp.float32).astype(jnp.bfloat16)
    t2 = jax.random.randint(k_t2, (N2,), 0, K2, dtype=jnp.int32)
    got2 = penalty_l1(x2, t2, K2, alpha2, block_rows=16)
    jax.block_until_ready(got2)
    check(got2, penalty_l1_ref(x2, t2, K2, alpha2))

    # Test 3: odd tile count across 2 cores -> clamped virtual tile, fully
    # masked duplicate (N=40, TN=16 -> 3 real tiles, 4 virtual).
    N3, K3, alpha3 = 40, 32, 2.0
    k_x3, k_t3, key = jax.random.split(key, 3)
    x3 = jax.random.normal(k_x3, (N3, K3), dtype=jnp.float32)
    t3 = jax.random.randint(k_t3, (N3,), 0, K3, dtype=jnp.int32)
    got3 = penalty_l1(x3, t3, K3, alpha3, block_rows=16)
    jax.block_until_ready(got3)
    check(got3, penalty_l1_ref(x3, t3, K3, alpha3))

    print("KERNEL_OK")
</pallas_src>

<mosaic_0001>
module attributes {stable_mosaic.version = 11 : i64} {
  func.func @penalty_l1_kernel(%arg0: i32, %arg1: i32, %arg2: memref<8x32xf32, #tpu.memory_space<vmem>>, %arg3: memref<8x1xi32, #tpu.memory_space<vmem>>, %arg4: memref<1x8x128xf32, #tpu.memory_space<vmem>>, %arg5: memref<8x1xf32, #tpu.memory_space<vmem>>, %arg6: memref<8x1xf32, #tpu.memory_space<vmem>>) attributes {dimension_semantics = [#tpu.dimension_semantics<parallel>, #tpu.dimension_semantics<arbitrary>], iteration_bounds = array<i64: 1, 1>, scalar_prefetch = 0 : i64, scratch_operands = 2 : i64, tpu.core_type = #tpu.core_type<tc>, window_params = [{transform_indices = @transform_0, window_bounds = array<i64: 8, 32>}, {transform_indices = @transform_1, window_bounds = array<i64: 8, 1>}, {transform_indices = @transform_2, window_bounds = array<i64: 1, 8, 128>}]} {
    %c0_i32 = arith.constant 0 : i32
    %0 = arith.cmpi eq, %arg1, %c0_i32 : i32
    %1 = arith.extui %0 : i1 to i32
    %c0_i32_0 = arith.constant 0 : i32
    %2 = arith.cmpi ne, %1, %c0_i32_0 : i32
    scf.if %2 {
      %cst_19 = arith.constant 0.000000e+00 : f32
      %40 = vector.broadcast %cst_19 : f32 to vector<8x1xf32>
      %c0_20 = arith.constant 0 : index
      %c0_21 = arith.constant 0 : index
      %41 = vector.load %arg5[%c0_20, %c0_21] : memref<8x1xf32, #tpu.memory_space<vmem>>, vector<8x1xf32>
      tpu.vector_store %arg5[%c0_20, %c0_21], %40 {strides = array<i32>} : memref<8x1xf32, #tpu.memory_space<vmem>>, vector<8x1xf32>,
      %cst_22 = arith.constant 0.000000e+00 : f32
      %42 = vector.broadcast %cst_22 : f32 to vector<8x1xf32>
      %c0_23 = arith.constant 0 : index
      %c0_24 = arith.constant 0 : index
      %43 = vector.load %arg6[%c0_23, %c0_24] : memref<8x1xf32, #tpu.memory_space<vmem>>, vector<8x1xf32>
      tpu.vector_store %arg6[%c0_23, %c0_24], %42 {strides = array<i32>} : memref<8x1xf32, #tpu.memory_space<vmem>>, vector<8x1xf32>,
    } else {
    }
    %c0 = arith.constant 0 : index
    %c0_1 = arith.constant 0 : index
    %3 = vector.load %arg2[%c0, %c0_1] : memref<8x32xf32, #tpu.memory_space<vmem>>, vector<8x32xf32>
    %c0_2 = arith.constant 0 : index
    %c0_3 = arith.constant 0 : index
    %4 = vector.load %arg3[%c0_2, %c0_3] : memref<8x1xi32, #tpu.memory_space<vmem>>, vector<8x1xi32>
    %cst = arith.constant dense<0xFF800000> : vector<8xf32>
    %5 = vector.multi_reduction <maximumf>, %3, %cst [1] : vector<8x32xf32> to vector<8xf32>
    %6 = vector.shape_cast %5 : vector<8xf32> to vector<8x1xf32>
    %7 = vector.broadcast %6 : vector<8x1xf32> to vector<8x32xf32>
    %8 = arith.subf %3, %7 : vector<8x32xf32>
    %9 = math.exp %8 : vector<8x32xf32>
    %cst_4 = arith.constant dense<0.000000e+00> : vector<8xf32>
    %10 = vector.multi_reduction <add>, %9, %cst_4 [1] : vector<8x32xf32> to vector<8xf32>
    %11 = vector.shape_cast %10 : vector<8xf32> to vector<8x1xf32>
    %12 = math.log %11 : vector<8x1xf32>
    %13 = arith.addf %6, %12 : vector<8x1xf32>
    %14 = tpu.iota {dimensions = array<i32: 1>} : vector<8x32xi32>
    %15 = vector.broadcast %4 : vector<8x1xi32> to vector<8x32xi32>
    %16 = arith.cmpi eq, %14, %15 : vector<8x32xi32>
    %cst_5 = arith.constant 0.000000e+00 : f32
    %17 = vector.broadcast %cst_5 : f32 to vector<8x32xf32>
    %18 = arith.select %16, %3, %17 : vector<8x32xi1>, vector<8x32xf32>
    %cst_6 = arith.constant dense<0.000000e+00> : vector<8xf32>
    %19 = vector.multi_reduction <add>, %18, %cst_6 [1] : vector<8x32xf32> to vector<8xf32>
    %20 = vector.shape_cast %19 : vector<8xf32> to vector<8x1xf32>
    %21 = arith.subf %13, %20 : vector<8x1xf32>
    %22 = tpu.reciprocal %11 {approx = true} : vector<8x1xf32> -> vector<8x1xf32>
    %cst_7 = arith.constant 3.125000e-02 : f32
    %23 = vector.broadcast %cst_7 : f32 to vector<8x1xf32>
    %24 = arith.mulf %11, %23 : vector<8x1xf32>
    %25 = vector.broadcast %24 : vector<8x1xf32> to vector<8x32xf32>
    %26 = arith.subf %9, %25 : vector<8x32xf32>
    %27 = math.absf %26 : vector<8x32xf32>
    %cst_8 = arith.constant dense<0.000000e+00> : vector<8xf32>
    %28 = vector.multi_reduction <add>, %27, %cst_8 [1] : vector<8x32xf32> to vector<8xf32>
    %29 = vector.shape_cast %28 : vector<8xf32> to vector<8x1xf32>
    %30 = arith.mulf %22, %29 : vector<8x1xf32>
    %c0_9 = arith.constant 0 : index
    %c0_10 = arith.constant 0 : index
    %31 = vector.load %arg5[%c0_9, %c0_10] : memref<8x1xf32, #tpu.memory_space<vmem>>, vector<8x1xf32>
    %32 = arith.addf %31, %21 : vector<8x1xf32>
    %c0_11 = arith.constant 0 : index
    %c0_12 = arith.constant 0 : index
    %33 = vector.load %arg5[%c0_11, %c0_12] : memref<8x1xf32, #tpu.memory_space<vmem>>, vector<8x1xf32>
    tpu.vector_store %arg5[%c0_11, %c0_12], %32 {strides = array<i32>} : memref<8x1xf32, #tpu.memory_space<vmem>>, vector<8x1xf32>,
    %c0_13 = arith.constant 0 : index
    %c0_14 = arith.constant 0 : index
    %34 = vector.load %arg6[%c0_13, %c0_14] : memref<8x1xf32, #tpu.memory_space<vmem>>, vector<8x1xf32>
    %35 = arith.addf %34, %30 : vector<8x1xf32>
    %c0_15 = arith.constant 0 : index
    %c0_16 = arith.constant 0 : index
    %36 = vector.load %arg6[%c0_15, %c0_16] : memref<8x1xf32, #tpu.memory_space<vmem>>, vector<8x1xf32>
    tpu.vector_store %arg6[%c0_15, %c0_16], %35 {strides = array<i32>} : memref<8x1xf32, #tpu.memory_space<vmem>>, vector<8x1xf32>,
    %c0_i32_17 = arith.constant 0 : i32
    %37 = arith.cmpi eq, %arg1, %c0_i32_17 : i32
    %38 = arith.extui %37 : i1 to i32
    %c0_i32_18 = arith.constant 0 : i32
    %39 = arith.cmpi ne, %38, %c0_i32_18 : i32
    scf.if %39 {
      %c0_19 = arith.constant 0 : index
      %c0_20 = arith.constant 0 : index
      %40 = vector.load %arg5[%c0_19, %c0_20] : memref<8x1xf32, #tpu.memory_space<vmem>>, vector<8x1xf32>
      %41 = vector.shape_cast %40 : vector<8x1xf32> to vector<1x8x1xf32>
      %cst_21 = arith.constant dense<0.000000e+00> : vector<1xf32>
      %42 = vector.multi_reduction <add>, %41, %cst_21 [1, 2] : vector<1x8x1xf32> to vector<1xf32>
      %43 = vector.shape_cast %42 : vector<1xf32> to vector<1x1x1xf32>
      %44 = vector.extract %43[0, 0, 0] : f32 from vector<1x1x1xf32>
      %c0_22 = arith.constant 0 : index
      %c0_23 = arith.constant 0 : index
      %45 = vector.load %arg6[%c0_22, %c0_23] : memref<8x1xf32, #tpu.memory_space<vmem>>, vector<8x1xf32>
      %46 = vector.shape_cast %45 : vector<8x1xf32> to vector<1x8x1xf32>
      %cst_24 = arith.constant dense<0.000000e+00> : vector<1xf32>
      %47 = vector.multi_reduction <add>, %46, %cst_24 [1, 2] : vector<1x8x1xf32> to vector<1xf32>
      %48 = vector.shape_cast %47 : vector<1xf32> to vector<1x1x1xf32>
      %49 = vector.extract %48[0, 0, 0] : f32 from vector<1x1x1xf32>
      %50 = tpu.iota {dimensions = array<i32: 2>} : vector<1x8x128xi32>
      %c0_i32_25 = arith.constant 0 : i32
      %51 = vector.broadcast %c0_i32_25 : i32 to vector<1x8x128xi32>
      %52 = arith.cmpi eq, %50, %51 : vector<1x8x128xi32>
      %c1_i32 = arith.constant 1 : i32
      %53 = vector.broadcast %c1_i32 : i32 to vector<1x8x128xi32>
      %54 = arith.cmpi eq, %50, %53 : vector<1x8x128xi32>
      %cst_26 = arith.constant 0.000000e+00 : f32
      %55 = vector.broadcast %49 : f32 to vector<1x8x128xf32>
      %56 = vector.broadcast %cst_26 : f32 to vector<1x8x128xf32>
      %57 = arith.select %54, %55, %56 : vector<1x8x128xi1>, vector<1x8x128xf32>
      %58 = vector.broadcast %44 : f32 to vector<1x8x128xf32>
      %59 = arith.select %52, %58, %57 : vector<1x8x128xi1>, vector<1x8x128xf32>
      %c0_27 = arith.constant 0 : index
      %c0_28 = arith.constant 0 : index
      %c0_29 = arith.constant 0 : index
      %60 = vector.load %arg4[%c0_27, %c0_28, %c0_29] : memref<1x8x128xf32, #tpu.memory_space<vmem>>, vector<1x8x128xf32>
      tpu.vector_store %arg4[%c0_27, %c0_28, %c0_29], %59 {strides = array<i32>} : memref<1x8x128xf32, #tpu.memory_space<vmem>>, vector<1x8x128xf32>,
    } else {
    }
    return
  }
  func.func @transform_0(%arg0: i32, %arg1: i32) -> (i32, i32) {
    %c1_i32 = arith.constant 1 : i32
    %0 = arith.muli %arg0, %c1_i32 : i32
    %1 = arith.addi %0, %arg1 : i32
    %c0_i32 = arith.constant 0 : i32
    %c0_i32_0 = arith.constant 0 : i32
    return %1, %c0_i32 : i32, i32
  }
  func.func @transform_1(%arg0: i32, %arg1: i32) -> (i32, i32) {
    %c1_i32 = arith.constant 1 : i32
    %0 = arith.muli %arg0, %c1_i32 : i32
    %1 = arith.addi %0, %arg1 : i32
    %c0_i32 = arith.constant 0 : i32
    %c0_i32_0 = arith.constant 0 : i32
    return %1, %c0_i32 : i32, i32
  }
  func.func @transform_2(%arg0: i32, %arg1: i32) -> (i32, i32, i32) {
    %c0_i32 = arith.constant 0 : i32
    %c0_i32_0 = arith.constant 0 : i32
    %c0_i32_1 = arith.constant 0 : i32
    return %arg0, %c0_i32, %c0_i32_0 : i32, i32, i32
  }
}

</mosaic_0001>

<llo_original>
// kernel: tpu_custom_call.1
$region0: #{tpu_custom_call.1}
  #allocation0 [shape = 'u32[]', space=smem, size = 0x4, offset = 0x4, fixed_abs, tag = 'smem constant byte address 0x4 - core index']
  #allocation1 [shape = 'u32[72,128]{1,0:T(1,128)}', space=vmem, size = 0x9000, scoped, tag = 'internal scratch']
  #allocation2 [shape = 'f32[8,1]{1,0:T(8,128)}', space=vmem, size = 0x1000, scoped, tag = 'scratch operand']
  #allocation3 [shape = 'f32[8,1]{1,0:T(8,128)}', space=vmem, size = 0x1000, scoped, tag = 'scratch operand']
  %s0 = inlined_call_operand.vmem [shape: f32[8,32], index: 0, kind: input, shape index: {}]
  %s1 = inlined_call_operand.vmem [shape: s32[8,1], index: 1, kind: input, shape index: {}]
  %s2 = inlined_call_operand.hbm [shape: f32[1,8,128], index: 2, kind: output, shape index: {}]
  %s3 = sld [smem:[#allocation0]]
  $region26: #{tpu_custom_call.1} parent=0
    _
  %s5 = ssub.s32 1, %s3
  %s6 = scalar_select 0, %s5, %s3
  $region1: #{tpu_custom_call.1} parent=0
    #allocation4 [shape = 'u8[4096]{0}', space=vmem, size = 0x1000, scoped, tag = 'output window, operand 0, single buffered']
    #allocation5 [shape = 's32[1]{0}', space=sflag, size = 0x4, scoped, tag = 'scoped memory for tpu_custom_call.1']
    %7 = vsyncpa [#allocation5], 0
    // Predicated region
    $region2: #{tpu_custom_call.1} parent=1 // pred_check
      _
    $region3: #{tpu_custom_call.1} parent=1 // pred_check_branch
      %9 = sbr.rel (0) target = $region5
    $region4: #{tpu_custom_call.1} parent=1 // pred_region
      %s10 = sadd.s32 0, 0
      %p11 = scmp.lt.s32.totalorder %s10, 0
      %s12 = scalar_select %p11, %s10, 0
      %s13 = smul.addr %s12, 8
      %s14 = scalar_lea.vmem %s0, %s13
      %s15 = sadd.s32 0, 0
    $region5: #{tpu_custom_call.1} parent=1 // pred_fallthru
      _
    // Predicated region
    $region6: #{tpu_custom_call.1} parent=1 // pred_check
      _
    $region7: #{tpu_custom_call.1} parent=1 // pred_check_branch
      %17 = sbr.rel (0) target = $region9
    $region8: #{tpu_custom_call.1} parent=1 // pred_region
      %s18 = sadd.s32 0, 0
      %p19 = scmp.lt.s32.totalorder %s18, 0
      %s20 = scalar_select %p19, %s18, 0
      %s21 = smul.addr %s20, 8
      %s22 = scalar_lea.vmem %s1, %s21
      %s23 = sadd.s32 0, 0
    $region9: #{tpu_custom_call.1} parent=1 // pred_fallthru
      _
    %s24 = sadd.s32 0, 0
    %p25 = scmp.lt.s32.totalorder %s24, 0
    %s26 = scalar_select %p25, %s24, 0
    %s27 = smul.addr %s26, 8
    %s28 = scalar_lea.vmem %s0, %s27
    %s29 = sadd.s32 0, 0
    %p30 = scmp.lt.s32.totalorder %s29, 0
    %s31 = scalar_select %p30, %s29, 0
    %s32 = smul.addr %s31, 8
    %s33 = scalar_lea.vmem %s1, %s32
    %s34 = sadd.s32 0, 0
    %p35 = scmp.lt.s32.totalorder %s34, 0
    %s36 = scalar_select %p35, %s34, 0
    %s37 = smul.addr %s36, 8
    %s38 = scalar_lea.vmem %s0, %s37
    %s39 = sadd.s32 0, 0
    %s40 = sadd.s32 0, 0
    %p41 = scmp.lt.s32.totalorder %s40, 0
    %s42 = scalar_select %p41, %s40, 0
    %s43 = smul.addr %s42, 8
    %s44 = scalar_lea.vmem %s1, %s43
    %s45 = sadd.s32 0, 0
    %p46 = scmp.eq.s32.totalorder 0, 0
    // Predicated region
    $region10: #{tpu_custom_call.1} parent=1 // pred_check
      %p47 = pneg %p46
    $region11: #{tpu_custom_call.1} parent=1 // pred_check_branch
      %49 = sbr.rel (%p47) target = $region13
    $region12: #{tpu_custom_call.1} parent=1 // pred_region
      %vm50 = vcmask 7168
      %51 = vst.msk [vmem:[#allocation2] sm:$0xff] %vm50, 0.0
      %52 = vst.msk [vmem:[#allocation3] sm:$0xff] %vm50, 0.0
    $region13: #{tpu_custom_call.1} parent=1 // pred_fallthru
      _
    %v53 = vld [vmem:[%s38] sm:$0xff]
    %v54 = vld [vmem:[%s44] sm:$0xff]
    %vm55 = vcmask 261120
    %v56 = vsel %vm55, %v53, -inf
    %57 = vmax.xlane.f32.xlu0 %v56
    %v58 = vpop.xlane.xlu0 %57
    %v59 = vsub.f32 %v53, %v58
    %v60 = vmul.f32 %v59, 1.442695
    %v61 = vpow.pop %v60
    %v62 = vsel %vm55, %v61, 0.0
    %63 = vadd.xlane.f32.xlu0 %v62
    %v64 = vpop.xlane.xlu0 %63
    %v65 = vlog2.pop %v64
    %v66 = vmul.f32 %v65, 0.6931472
    %v67 = vadd.f32 %v58, %v66
    %v68 = vlaneseq
    %v69 = vand.u32 %v68, 127
    %70 = vset.pattern.permute.xlu0 0
    %71 = vperm.xlu0 %70, %v54
    %v72 = vpop.permute.xlu0 %71
    %vm73 = vcmp.eq.s32.totalorder %v69, %v72
    %v74 = vsel %vm73, %v53, 0.0
    %v75 = vsel %vm55, %v74, 0.0
    %76 = vadd.xlane.f32.xlu0 %v75
    %v77 = vpop.xlane.xlu0 %76
    %v78 = vsub.f32 %v67, %v77
    %v79 = vrcp.pop %v64
    %v80 = vmul.f32 %v64, 0.03125
    %v81 = vsub.f32 %v61, %v80
    %v82 = vand.u32 2147483647, %v81
    %v83 = vsel %vm55, %v82, 0.0
    %84 = vadd.xlane.f32.xlu0 %v83
    %v85 = vpop.xlane.xlu0 %84
    %v86 = vmul.f32 %v79, %v85
    %v87 = vld [vmem:[#allocation2] sm:$0xff]
    %v88 = vadd.f32 %v87, %v78
    %vm89 = vcmask 7168
    %90 = vst.msk [vmem:[#allocation2] sm:$0xff] %vm89, %v88
    %v91 = vld [vmem:[#allocation3] sm:$0xff]
    %v92 = vadd.f32 %v91, %v86
    %93 = vst.msk [vmem:[#allocation3] sm:$0xff] %vm89, %v92
    // Predicated region
    $region14: #{tpu_custom_call.1} parent=1 // pred_check
      %p94 = pneg %p46
    $region15: #{tpu_custom_call.1} parent=1 // pred_check_branch
      %96 = sbr.rel (%p94) target = $region17
    $region16: #{tpu_custom_call.1} parent=1 // pred_region
      %v97 = vld [vmem:[#allocation2] sm:$0xff]
      %v98 = vsel %vm89, %v97, 0.0
      %99 = vadd.xlane.f32.xlu0 %v98
      %v100 = vpop.xlane.xlu0 %99
      %v101 = vrot.slane %v100, 4
      %v102 = vadd.f32 %v100, %v101
      %v103 = vrot.slane %v102, 2
      %v104 = vadd.f32 %v102, %v103
      %v105 = vrot.slane %v104, 1
      %v106 = vadd.f32 %v104, %v105
      %s107 = vtos %v106
      %v108 = vld [vmem:[#allocation3] sm:$0xff]
      %v109 = vsel %vm89, %v108, 0.0
      %110 = vadd.xlane.f32.xlu0 %v109
      %v111 = vpop.xlane.xlu0 %110
      %v112 = vrot.slane %v111, 4
      %v113 = vadd.f32 %v111, %v112
      %v114 = vrot.slane %v113, 2
      %v115 = vadd.f32 %v113, %v114
      %v116 = vrot.slane %v115, 1
      %v117 = vadd.f32 %v115, %v116
      %s118 = vtos %v117
      %vm119 = vcmp.eq.s32.totalorder %v69, 0
      %vm120 = vcmp.eq.s32.totalorder %v69, 1
      %v121 = vstv %s118
      %v122 = vsel %vm120, %v121, 0.0
      %v123 = vstv %s107
      %v124 = vsel %vm119, %v123, %v122
      %125 = vst [vmem:[#allocation4] sm:$0xff] %v124
    $region17: #{tpu_custom_call.1} parent=1 // pred_fallthru
      _
    // Predicated region
    $region18: #{tpu_custom_call.1} parent=1 // pred_check
      _
    $region19: #{tpu_custom_call.1} parent=1 // pred_check_branch
      %127 = sbr.rel (0) target = $region21
    $region20: #{tpu_custom_call.1} parent=1 // pred_region
      %129 = vsyncadd [#allocation5], 0
      %s131 = sshll.u32 [#allocation4], 4
      %s132 = int_to_ptr.vmem [resolvable:$true] %s131
      %s133 = sshll.u32 %s2, 4
      %s134 = int_to_ptr.hbm [resolvable:$true] %s133
      %136 = dma.vmem_to_hbm [thread:$0]  %s132, 128, %s134, [#allocation5]
    $region21: #{tpu_custom_call.1} parent=1 // pred_fallthru
      _
    // Predicated region
    $region22: #{tpu_custom_call.1} parent=1 // pred_check
      _
    $region23: #{tpu_custom_call.1} parent=1 // pred_check_branch
      %138 = sbr.rel (0) target = $region25
    $region24: #{tpu_custom_call.1} parent=1 // pred_region
      %140 = dma.done [#allocation5], 128
    $region25: #{tpu_custom_call.1} parent=1 // pred_fallthru
      _
    %141 = vsyncpa [#allocation5], 1

</llo_original>
